<compile_context>
chip_gen: v5e
topology: v5e:2x2
jax: 0.10.0
libtpu: 0.0.40
codegen_flags: <defaults>
</compile_context>

<pallas_src>
import numpy as np
import jax
import jax.numpy as jnp
from jax import lax
from jax.experimental import pallas as pl
from jax.experimental.pallas import tpu as pltpu


# --------------------------------------------------------------------------- #
# Kernel
# --------------------------------------------------------------------------- #
def conv_block_kernel(x_ref, w1_ref, w2_ref, b_ref, o_ref):
    """One grid step processes `Bb` batch elements, fully lane-folded.

    x_ref  : (Bb, H, W*Cin)          bf16  folded NHWC activations
    w1_ref : (3*W*Cin,  W*Cout)      bf16  banded conv1 weights (BN folded)
    w2_ref : (3*W*Cout, W*Cout)      bf16  banded conv2 weights (BN folded)
    b_ref  : (2, W*Cout)             f32   folded per-(j,c) biases, layer 1 / 2
    o_ref  : (Bb, H, W*Cout)         f32   lane-dense output
    """
    Bb, H, _ = x_ref.shape

    def conv3x3_bias_relu(a3, w_ref, bias_row):
        # a3: (Bb, H, W*C) bf16.  Build K = [row i-1 | row i | row i+1] and do
        # one MXU matmul against the banded weight; the dx taps and the SAME
        # padding along W live inside the weight, the dy padding is the zero
        # row.  Result is already folded (Bb*H, W*Cout) f32 — no tap combining.
        wc = a3.shape[-1]
        zrow = jnp.zeros((Bb, 1, wc), a3.dtype)
        ap = jnp.concatenate([zrow, a3, zrow], axis=1)               # (Bb, H+2, WC)
        lhs = jnp.concatenate(
            [ap[:, 0:H], ap[:, 1:H + 1], ap[:, 2:H + 2]], axis=-1)   # (Bb, H, 3*WC)
        y = jnp.dot(lhs.reshape(Bb * H, 3 * wc), w_ref[...],
                    preferred_element_type=jnp.float32)              # (Bb*H, W*Cout)
        return jnp.maximum(y + bias_row, 0.0)                        # bias + ReLU

    b_all = b_ref[...]                                               # (2, W*Cout)
    wcout = b_all.shape[-1]
    y1 = conv3x3_bias_relu(x_ref[...], w1_ref, b_all[0:1, :])
    # conv2 input is re-rounded to bf16 for the MXU (compounds bf16 rounding
    # across both layers — intentional, tolerance 3e-2 vs the f32 reference).
    y2 = conv3x3_bias_relu(y1.reshape(Bb, H, wcout).astype(jnp.bfloat16),
                           w2_ref, b_all[1:2, :])
    o_ref[...] = y2.reshape(Bb, H, wcout)                            # lane-dense store


# --------------------------------------------------------------------------- #
# Wrapper-side weight preparation
# --------------------------------------------------------------------------- #
def _fold_bn_into_conv(w, b, gamma, beta, mean, var, eps):
    """Fold eval-mode BatchNorm + conv bias into the conv weights / one bias."""
    scale = gamma / jnp.sqrt(var + eps)
    return w * scale, (b - mean) * scale + beta


def _banded_weight(w_f, W):
    """(3, 3, Cin, Cout) HWIO -> (3*W*Cin, W*Cout) banded matrix.

    Row layout (dy, j_in, cin), column layout (j_out, cout); entry equals
    w_f[dy, j_in - j_out + 1, cin, cout] inside the 3-wide band and 0 outside
    (which implements the SAME padding along W for free).
    """
    sel = np.zeros((3, W, W), np.float32)            # sel[dx, j_in, j_out]
    for dx in range(3):
        for jo in range(W):
            ji = jo + dx - 1
            if 0 <= ji < W:
                sel[dx, ji, jo] = 1.0
    wb = jnp.einsum('xao,yxck->yacok', jnp.asarray(sel), w_f)
    Cin, Cout = w_f.shape[2], w_f.shape[3]
    return wb.reshape(3 * W * Cin, W * Cout).astype(jnp.bfloat16)


def _resident_spec(shape):
    """BlockSpec for a grid-invariant input: single-buffer it (review item)."""
    index_map = lambda n: (0,) * len(shape)
    try:
        return pl.BlockSpec(shape, index_map, pipeline_mode=pl.Buffered(1))
    except TypeError:        # older jax without the pipeline_mode kwarg
        return pl.BlockSpec(shape, index_map)


def conv_block_forward(x_nchw, params, *, batch_block=1, eps=1e-5):
    """x_nchw: (N, Cin, H, W) f32  ->  (N, Cout, H, W) f32 (matches nn.Module)."""
    N, Cin, H, W = x_nchw.shape
    Cout = params["w1"].shape[-1]

    # NCHW -> NHWC -> lane-folded (N, H, W*Cin), bf16 MXU operand.
    x = jnp.transpose(x_nchw, (0, 2, 3, 1)).astype(jnp.bfloat16).reshape(N, H, W * Cin)

    w1f, b1f = _fold_bn_into_conv(params["w1"], params["b1"], params["g1"],
                                  params["be1"], params["m1"], params["v1"], eps)
    w2f, b2f = _fold_bn_into_conv(params["w2"], params["b2"], params["g2"],
                                  params["be2"], params["m2"], params["v2"], eps)
    w1b = _banded_weight(w1f, W)                                    # (3*W*Cin,  W*Cout)
    w2b = _banded_weight(w2f, W)                                    # (3*W*Cout, W*Cout)
    bias = jnp.stack([jnp.tile(b1f, W), jnp.tile(b2f, W)], 0).astype(jnp.float32)

    Bb = batch_block
    assert N % Bb == 0, "batch_block must divide N"
    # TODO(synk): for large H/W/C add an H-tile grid axis with a 1-row halo,
    # set vmem_limit_bytes (v7x: 64 MiB physical), and fall back to per-pixel-K
    # (im2col) matmuls once 3*W*C outgrows a few lane tiles; at these shapes
    # everything fits trivially and the banded-weight path is strictly better.

    out = pl.pallas_call(
        conv_block_kernel,
        out_shape=jax.ShapeDtypeStruct((N, H, W * Cout), jnp.float32),
        grid_spec=pltpu.PrefetchScalarGridSpec(
            num_scalar_prefetch=0,
            grid=(N // Bb,),
            in_specs=[
                pl.BlockSpec((Bb, H, W * Cin), lambda n: (n, 0, 0)),
                _resident_spec((3 * W * Cin, W * Cout)),
                _resident_spec((3 * W * Cout, W * Cout)),
                _resident_spec((2, W * Cout)),
            ],
            out_specs=pl.BlockSpec((Bb, H, W * Cout), lambda n: (n, 0, 0)),
        ),
        compiler_params=pltpu.CompilerParams(
            dimension_semantics=("parallel",)),   # N//Bb >= 2 keeps both v7x TCs busy
    )(x, w1b, w2b, bias)

    out = out.reshape(N, H, W, Cout)              # free un-fold of the folded lanes
    # TODO(synk): keep NHWC / bf16 downstream to skip this extra HBM pass when
    # the caller does not require the PyTorch NCHW / f32 layout.
    return jnp.transpose(out, (0, 3, 1, 2)).astype(jnp.float32)


# --------------------------------------------------------------------------- #
# Plain-JAX reference & parameter init
# --------------------------------------------------------------------------- #
def ref_forward(x_nchw, params, eps=1e-5):
    x = jnp.transpose(x_nchw, (0, 2, 3, 1))

    def layer(x, w, b, g, be, mu, var):
        y = lax.conv_general_dilated(
            x, w, window_strides=(1, 1), padding="SAME",
            dimension_numbers=("NHWC", "HWIO", "NHWC"))
        y = y + b.reshape(1, 1, 1, -1)
        y = (y - mu) / jnp.sqrt(var + eps) * g + be           # BN (eval mode)
        return jnp.maximum(y, 0.0)

    y = layer(x, params["w1"], params["b1"], params["g1"], params["be1"],
              params["m1"], params["v1"])
    y = layer(y, params["w2"], params["b2"], params["g2"], params["be2"],
              params["m2"], params["v2"])
    return jnp.transpose(y, (0, 3, 1, 2))


def init_params(key, ch_in, ch_out):
    """Deterministic params mimicking a PyTorch conv_block in eval mode."""
    ks = jax.random.split(key, 12)

    def conv_init(kw, kb, cin, cout):
        bound = 1.0 / jnp.sqrt(cin * 9.0)
        w = jax.random.uniform(kw, (3, 3, cin, cout), jnp.float32, -bound, bound)
        b = jax.random.uniform(kb, (cout,), jnp.float32, -bound, bound)
        return w, b

    def bn_init(kg, kb, km, kv, cout):
        gamma = 1.0 + 0.1 * jax.random.normal(kg, (cout,), jnp.float32)
        beta = 0.1 * jax.random.normal(kb, (cout,), jnp.float32)
        mean = 0.1 * jax.random.normal(km, (cout,), jnp.float32)
        var = jax.random.uniform(kv, (cout,), jnp.float32, 0.5, 1.5)
        return gamma, beta, mean, var

    w1, b1 = conv_init(ks[0], ks[1], ch_in, ch_out)
    g1, be1, m1, v1 = bn_init(ks[2], ks[3], ks[4], ks[5], ch_out)
    w2, b2 = conv_init(ks[6], ks[7], ch_out, ch_out)
    g2, be2, m2, v2 = bn_init(ks[8], ks[9], ks[10], ks[11], ch_out)
    return dict(w1=w1, b1=b1, g1=g1, be1=be1, m1=m1, v1=v1,
                w2=w2, b2=b2, g2=g2, be2=be2, m2=m2, v2=v2)


# --------------------------------------------------------------------------- #
if __name__ == "__main__":
    key = jax.random.PRNGKey(0)
    k_x, k_p = jax.random.split(key)

    N, C_IN, C_OUT, H, W = 2, 4, 8, 16, 16
    x = jax.random.normal(k_x, (N, C_IN, H, W), jnp.float32)
    params = init_params(k_p, C_IN, C_OUT)

    out = conv_block_forward(x, params)
    out = jax.block_until_ready(out)

    ref = jax.block_until_ready(ref_forward(x, params))
    assert out.shape == (N, C_OUT, H, W)
    # bf16 MXU operands (both layers) -> relaxed tolerance vs the f32 reference.
    assert jnp.allclose(out, ref, atol=3e-2, rtol=3e-2), (
        f"max err {jnp.max(jnp.abs(out - ref))}")

    print("KERNEL_OK")
</pallas_src>

<mosaic_0001>
module attributes {stable_mosaic.version = 11 : i64} {
  func.func @conv_block_kernel(%arg0: i32, %arg1: memref<1x16x64xbf16, #tpu.memory_space<vmem>>, %arg2: memref<192x128xbf16, #tpu.memory_space<vmem>>, %arg3: memref<384x128xbf16, #tpu.memory_space<vmem>>, %arg4: memref<2x128xf32, #tpu.memory_space<vmem>>, %arg5: memref<1x16x128xf32, #tpu.memory_space<vmem>>) attributes {dimension_semantics = [#tpu.dimension_semantics<parallel>], iteration_bounds = array<i64: 2>, scalar_prefetch = 0 : i64, scratch_operands = 0 : i64, tpu.core_type = #tpu.core_type<tc>, window_params = [{transform_indices = @transform_0, window_bounds = array<i64: 1, 16, 64>}, {pipeline_mode = #tpu.pipeline_mode<synchronous>, transform_indices = @transform_1, window_bounds = array<i64: 192, 128>}, {pipeline_mode = #tpu.pipeline_mode<synchronous>, transform_indices = @transform_2, window_bounds = array<i64: 384, 128>}, {pipeline_mode = #tpu.pipeline_mode<synchronous>, transform_indices = @transform_3, window_bounds = array<i64: 2, 128>}, {transform_indices = @transform_4, window_bounds = array<i64: 1, 16, 128>}]} {
    %c0 = arith.constant 0 : index
    %c0_0 = arith.constant 0 : index
    %0 = vector.load %arg4[%c0, %c0_0] : memref<2x128xf32, #tpu.memory_space<vmem>>, vector<2x128xf32>
    %c0_1 = arith.constant 0 : index
    %c0_2 = arith.constant 0 : index
    %c0_3 = arith.constant 0 : index
    %1 = vector.load %arg1[%c0_1, %c0_2, %c0_3] : memref<1x16x64xbf16, #tpu.memory_space<vmem>>, vector<1x16x64xbf16>
    %2 = vector.extract_strided_slice %0 {offsets = [0, 0], sizes = [1, 128], strides = [1, 1]} : vector<2x128xf32> to vector<1x128xf32>
    %cst = arith.constant 0.000000e+00 : bf16
    %3 = vector.broadcast %cst : bf16 to vector<1x1x64xbf16>
    %4 = tpu.concatenate %3, %1, %3 in 1 : vector<1x1x64xbf16>, vector<1x16x64xbf16>, vector<1x1x64xbf16> -> vector<1x18x64xbf16>
    %5 = vector.extract_strided_slice %4 {offsets = [0, 0, 0], sizes = [1, 16, 64], strides = [1, 1, 1]} : vector<1x18x64xbf16> to vector<1x16x64xbf16>
    %6 = vector.extract_strided_slice %4 {offsets = [0, 1, 0], sizes = [1, 16, 64], strides = [1, 1, 1]} : vector<1x18x64xbf16> to vector<1x16x64xbf16>
    %7 = vector.extract_strided_slice %4 {offsets = [0, 2, 0], sizes = [1, 16, 64], strides = [1, 1, 1]} : vector<1x18x64xbf16> to vector<1x16x64xbf16>
    %8 = tpu.concatenate %5, %6, %7 in 2 : vector<1x16x64xbf16>, vector<1x16x64xbf16>, vector<1x16x64xbf16> -> vector<1x16x192xbf16>
    %9 = vector.shape_cast %8 : vector<1x16x192xbf16> to vector<16x192xbf16>
    %c0_4 = arith.constant 0 : index
    %c0_5 = arith.constant 0 : index
    %10 = vector.load %arg2[%c0_4, %c0_5] : memref<192x128xbf16, #tpu.memory_space<vmem>>, vector<192x128xbf16>
    %cst_6 = arith.constant dense<0.000000e+00> : vector<16x128xf32>
    %11 = tpu.matmul %9, %10, %cst_6 {dimension_numbers = #tpu.dot_dimension_numbers<[1], [0], [0], [1], [0, 0, 1, 1], [], []>} : vector<16x192xbf16>, vector<192x128xbf16>, vector<16x128xf32> -> vector<16x128xf32>
    %12 = vector.broadcast %2 : vector<1x128xf32> to vector<16x128xf32>
    %13 = arith.addf %11, %12 : vector<16x128xf32>
    %cst_7 = arith.constant 0.000000e+00 : f32
    %14 = vector.broadcast %cst_7 : f32 to vector<16x128xf32>
    %15 = arith.maximumf %13, %14 : vector<16x128xf32>
    %16 = vector.shape_cast %15 : vector<16x128xf32> to vector<1x16x128xf32>
    %17 = arith.truncf %16 : vector<1x16x128xf32> to vector<1x16x128xbf16>
    %18 = vector.extract_strided_slice %0 {offsets = [1, 0], sizes = [1, 128], strides = [1, 1]} : vector<2x128xf32> to vector<1x128xf32>
    %cst_8 = arith.constant 0.000000e+00 : bf16
    %19 = vector.broadcast %cst_8 : bf16 to vector<1x1x128xbf16>
    %20 = tpu.concatenate %19, %17, %19 in 1 : vector<1x1x128xbf16>, vector<1x16x128xbf16>, vector<1x1x128xbf16> -> vector<1x18x128xbf16>
    %21 = vector.extract_strided_slice %20 {offsets = [0, 0, 0], sizes = [1, 16, 128], strides = [1, 1, 1]} : vector<1x18x128xbf16> to vector<1x16x128xbf16>
    %22 = vector.extract_strided_slice %20 {offsets = [0, 1, 0], sizes = [1, 16, 128], strides = [1, 1, 1]} : vector<1x18x128xbf16> to vector<1x16x128xbf16>
    %23 = vector.extract_strided_slice %20 {offsets = [0, 2, 0], sizes = [1, 16, 128], strides = [1, 1, 1]} : vector<1x18x128xbf16> to vector<1x16x128xbf16>
    %24 = tpu.concatenate %21, %22, %23 in 2 : vector<1x16x128xbf16>, vector<1x16x128xbf16>, vector<1x16x128xbf16> -> vector<1x16x384xbf16>
    %25 = vector.shape_cast %24 : vector<1x16x384xbf16> to vector<16x384xbf16>
    %c0_9 = arith.constant 0 : index
    %c0_10 = arith.constant 0 : index
    %26 = vector.load %arg3[%c0_9, %c0_10] : memref<384x128xbf16, #tpu.memory_space<vmem>>, vector<384x128xbf16>
    %cst_11 = arith.constant dense<0.000000e+00> : vector<16x128xf32>
    %27 = tpu.matmul %25, %26, %cst_11 {dimension_numbers = #tpu.dot_dimension_numbers<[1], [0], [0], [1], [0, 0, 1, 1], [], []>} : vector<16x384xbf16>, vector<384x128xbf16>, vector<16x128xf32> -> vector<16x128xf32>
    %28 = vector.broadcast %18 : vector<1x128xf32> to vector<16x128xf32>
    %29 = arith.addf %27, %28 : vector<16x128xf32>
    %cst_12 = arith.constant 0.000000e+00 : f32
    %30 = vector.broadcast %cst_12 : f32 to vector<16x128xf32>
    %31 = arith.maximumf %29, %30 : vector<16x128xf32>
    %32 = vector.shape_cast %31 : vector<16x128xf32> to vector<1x16x128xf32>
    %c0_13 = arith.constant 0 : index
    %c0_14 = arith.constant 0 : index
    %c0_15 = arith.constant 0 : index
    %33 = vector.load %arg5[%c0_13, %c0_14, %c0_15] : memref<1x16x128xf32, #tpu.memory_space<vmem>>, vector<1x16x128xf32>
    tpu.vector_store %arg5[%c0_13, %c0_14, %c0_15], %32 {strides = array<i32>} : memref<1x16x128xf32, #tpu.memory_space<vmem>>, vector<1x16x128xf32>,
    return
  }
  func.func @transform_0(%arg0: i32) -> (i32, i32, i32) {
    %c0_i32 = arith.constant 0 : i32
    %c0_i32_0 = arith.constant 0 : i32
    %c0_i32_1 = arith.constant 0 : i32
    return %arg0, %c0_i32, %c0_i32_0 : i32, i32, i32
  }
  func.func @transform_1(%arg0: i32) -> (i32, i32) {
    %c0_i32 = arith.constant 0 : i32
    %c0_i32_0 = arith.constant 0 : i32
    %c0_i32_1 = arith.constant 0 : i32
    return %c0_i32, %c0_i32_0 : i32, i32
  }
  func.func @transform_2(%arg0: i32) -> (i32, i32) {
    %c0_i32 = arith.constant 0 : i32
    %c0_i32_0 = arith.constant 0 : i32
    %c0_i32_1 = arith.constant 0 : i32
    return %c0_i32, %c0_i32_0 : i32, i32
  }
  func.func @transform_3(%arg0: i32) -> (i32, i32) {
    %c0_i32 = arith.constant 0 : i32
    %c0_i32_0 = arith.constant 0 : i32
    %c0_i32_1 = arith.constant 0 : i32
    return %c0_i32, %c0_i32_0 : i32, i32
  }
  func.func @transform_4(%arg0: i32) -> (i32, i32, i32) {
    %c0_i32 = arith.constant 0 : i32
    %c0_i32_0 = arith.constant 0 : i32
    %c0_i32_1 = arith.constant 0 : i32
    return %arg0, %c0_i32, %c0_i32_0 : i32, i32, i32
  }
}

</mosaic_0001>

<llo_original>
// kernel: tpu_custom_call.1
$region0: #{tpu_custom_call.1}
  #allocation0 [shape = 'u32[]', space=smem, size = 0x4, offset = 0x4, fixed_abs, tag = 'smem constant byte address 0x4 - core index']
  #allocation1 [shape = 'u32[72,128]{1,0:T(1,128)}', space=vmem, size = 0x9000, scoped, tag = 'internal scratch']
  %s0 = inlined_call_operand.hbm [shape: bf16[2,16,64], index: 0, kind: input, shape index: {}]
  %s1 = inlined_call_operand.hbm [shape: bf16[192,128], index: 1, kind: input, shape index: {}]
  %s2 = inlined_call_operand.hbm [shape: bf16[384,128], index: 2, kind: input, shape index: {}]
  %s3 = inlined_call_operand.vmem [shape: f32[2,128], index: 3, kind: input, shape index: {}]
  %s4 = inlined_call_operand.hbm [shape: f32[2,16,128], index: 4, kind: output, shape index: {}]
  %s5 = sld [smem:[#allocation0]]
  $region61: #{tpu_custom_call.1} parent=0
    _
  %s7 = ssub.s32 1, %s5
  %s8 = scalar_select 0, %s7, %s5
  $region1: #{tpu_custom_call.1} parent=0
    #allocation2 [shape = 'u8[8192]{0}', space=vmem, size = 0x2000, scoped, tag = 'input window, operand 0']
    #allocation3 [shape = 's32[2]{0}', space=sflag, size = 0x8, scoped, tag = 'scoped memory for tpu_custom_call.1']
    #allocation4 [shape = 's32[2]{0}', space=sflag, size = 0x8, scoped, tag = 'scoped memory for tpu_custom_call.1']
    #allocation5 [shape = 'u8[49152]{0}', space=vmem, size = 0xc000, scoped, tag = 'input window, operand 1, single buffered']
    #allocation6 [shape = 's32[1]{0}', space=sflag, size = 0x4, scoped, tag = 'scoped memory for tpu_custom_call.1']
    #allocation7 [shape = 'u8[98304]{0}', space=vmem, size = 0x18000, scoped, tag = 'input window, operand 2, single buffered']
    #allocation8 [shape = 'u8[16384]{0}', space=vmem, size = 0x4000, scoped, tag = 'output window, operand 0']
    %9 = vsyncpa [#allocation3], 0
    %s10 = scalar_lea.sflag [#allocation3], 1
    %11 = vsyncpa %s10, 0
    %12 = vsyncpa [#allocation6], 0
    %13 = vsyncpa [#allocation4], 0
    %s14 = scalar_lea.sflag [#allocation4], 1
    %15 = vsyncpa %s14, 0
    loop: start=0, step=1, limit=4
    $region2: #{tpu_custom_call.1} parent=1 // loop_pre_header
      _
    $region3: #{tpu_custom_call.1} parent=1 // loop_header
      %s17 = sphi 0, %s21
      %p18 = scmp.ge.s32.totalorder %s17, 4
      %s27 = sphi 0, %s29
      %s30 = sphi 0, %s27
      %s31 = sphi 0, %s30
      %s47 = sphi 0, %s31
      %s51 = sphi 0, %s51
      %s53 = sphi 0, %s51
      %s54 = sphi 0, %s53
      %s68 = sphi 0, %s54
      %s72 = sphi 0, %s72
      %s74 = sphi 0, %s72
      %s75 = sphi 0, %s74
      %s89 = sphi 0, %s75
      %s93 = sphi 0, %s93
      %s95 = sphi 0, %s93
      %s96 = sphi 0, %s95
      %s110 = sphi 0, %s96
      %s116 = sphi 0, %s118
      %s119 = sphi 0, %s116
      %s120 = sphi 0, %s119
      %s136 = sphi 0, %s120
    $region4: #{tpu_custom_call.1} parent=1 // loop_header_branch
      %20 = sbr.rel (%p18) target = $region8
    $region5: #{tpu_custom_call.1} parent=1 // loop_body
      %s22 = ssub.s32 %s17, 1
      %s23 = ssub.s32 %s17, 2
      %s24 = sadd.s32 %s17, 1
      %s25 = ssub.s32 %s17, %s24
      %p26 = scmp.eq.s32.totalorder %s25, 0
      %s28 = sadd.s32 %s27, 1
      %s29 = scalar_select %p26, %s27, %s28
      %p32 = pneg %p26
      %p33 = scmp.eq.s32.totalorder %s17, 1
      %p34 = por %p32, %p33
      %p35 = scmp.ne.s32.totalorder %s27, %s30
      %p36 = scmp.eq.s32.totalorder %s17, 0
      %p37 = por %p35, %p36
      %p38 = scmp.ne.s32.totalorder %s27, %s30
      %p39 = scmp.eq.s32.totalorder %s22, 1
      %p40 = por %p38, %p39
      %p41 = scmp.ne.s32.totalorder %s30, %s31
      %p42 = scmp.eq.s32.totalorder %s22, 0
      %p43 = por %p41, %p42
      %p44 = scmp.ne.s32.totalorder %s30, %s31
      %p45 = scmp.eq.s32.totalorder %s23, 1
      %p46 = por %p44, %p45
      %p48 = scmp.ne.s32.totalorder %s31, %s47
      %p49 = scmp.eq.s32.totalorder %s23, 0
      %p50 = por %p48, %p49
      %s52 = sadd.s32 %s51, 1
      %p55 = scmp.eq.s32.totalorder %s17, 1
      %p56 = scmp.ne.s32.totalorder %s51, %s53
      %p57 = scmp.eq.s32.totalorder %s17, 0
      %p58 = por %p56, %p57
      %p59 = scmp.ne.s32.totalorder %s51, %s53
      %p60 = scmp.eq.s32.totalorder %s22, 1
      %p61 = por %p59, %p60
      %p62 = scmp.ne.s32.totalorder %s53, %s54
      %p63 = scmp.eq.s32.totalorder %s22, 0
      %p64 = por %p62, %p63
      %p65 = scmp.ne.s32.totalorder %s53, %s54
      %p66 = scmp.eq.s32.totalorder %s23, 1
      %p67 = por %p65, %p66
      %p69 = scmp.ne.s32.totalorder %s54, %s68
      %p70 = scmp.eq.s32.totalorder %s23, 0
      %p71 = por %p69, %p70
      %s73 = sadd.s32 %s72, 1
      %p76 = scmp.eq.s32.totalorder %s17, 1
      %p77 = scmp.ne.s32.totalorder %s72, %s74
      %p78 = scmp.eq.s32.totalorder %s17, 0
      %p79 = por %p77, %p78
      %p80 = scmp.ne.s32.totalorder %s72, %s74
      %p81 = scmp.eq.s32.totalorder %s22, 1
      %p82 = por %p80, %p81
      %p83 = scmp.ne.s32.totalorder %s74, %s75
      %p84 = scmp.eq.s32.totalorder %s22, 0
      %p85 = por %p83, %p84
      %p86 = scmp.ne.s32.totalorder %s74, %s75
      %p87 = scmp.eq.s32.totalorder %s23, 1
      %p88 = por %p86, %p87
      %p90 = scmp.ne.s32.totalorder %s75, %s89
      %p91 = scmp.eq.s32.totalorder %s23, 0
      %p92 = por %p90, %p91
      %s94 = sadd.s32 %s93, 1
      %p97 = scmp.eq.s32.totalorder %s17, 1
      %p98 = scmp.ne.s32.totalorder %s93, %s95
      %p99 = scmp.eq.s32.totalorder %s17, 0
      %p100 = por %p98, %p99
      %p101 = scmp.ne.s32.totalorder %s93, %s95
      %p102 = scmp.eq.s32.totalorder %s22, 1
      %p103 = por %p101, %p102
      %p104 = scmp.ne.s32.totalorder %s95, %s96
      %p105 = scmp.eq.s32.totalorder %s22, 0
      %p106 = por %p104, %p105
      %p107 = scmp.ne.s32.totalorder %s95, %s96
      %p108 = scmp.eq.s32.totalorder %s23, 1
      %p109 = por %p107, %p108
      %p111 = scmp.ne.s32.totalorder %s96, %s110
      %p112 = scmp.eq.s32.totalorder %s23, 0
      %p113 = por %p111, %p112
      %s114 = ssub.s32 %s17, %s24
      %p115 = scmp.eq.s32.totalorder %s114, 0
      %s117 = sadd.s32 %s116, 1
      %s118 = scalar_select %p115, %s116, %s117
      %p121 = pneg %p115
      %p122 = scmp.eq.s32.totalorder %s17, 1
      %p123 = por %p121, %p122
      %p124 = scmp.ne.s32.totalorder %s116, %s119
      %p125 = scmp.eq.s32.totalorder %s17, 0
      %p126 = por %p124, %p125
      %p127 = scmp.ne.s32.totalorder %s116, %s119
      %p128 = scmp.eq.s32.totalorder %s22, 1
      %p129 = por %p127, %p128
      %p130 = scmp.ne.s32.totalorder %s119, %s120
      %p131 = scmp.eq.s32.totalorder %s22, 0
      %p132 = por %p130, %p131
      %p133 = scmp.ne.s32.totalorder %s119, %s120
      %p134 = scmp.eq.s32.totalorder %s23, 1
      %p135 = por %p133, %p134
      %p137 = scmp.ne.s32.totalorder %s120, %s136
      %p138 = scmp.eq.s32.totalorder %s23, 0
      %p139 = por %p137, %p138
      %p140 = scmp.le.s32.totalorder 1, %s17
      %p141 = scmp.lt.s32.totalorder %s17, 3
      %p142 = pnand %p140, %p141
      %p143 = pneg %p142
      // Predicated region
      $region9: #{tpu_custom_call.1} parent=5 // pred_check
        _
      $region10: #{tpu_custom_call.1} parent=5 // pred_check_branch
        %145 = sbr.rel (%p142) target = $region12
      $region11: #{tpu_custom_call.1} parent=5 // pred_region
        %s146 = ssub.s32 %s17, 1
        // Predicated region
        $region13: #{tpu_custom_call.1} parent=11 // pred_check
          %p147 = pneg %p64
        $region14: #{tpu_custom_call.1} parent=11 // pred_check_branch
          %149 = sbr.rel (%p147) target = $region16
        $region15: #{tpu_custom_call.1} parent=11 // pred_region
          %151 = vsyncadd [#allocation6], 0
          %s152 = sshll.u32 %s1, 4
          %s153 = int_to_ptr.hbm [resolvable:$true] %s152
          %s154 = sshll.u32 [#allocation5], 4
          %s155 = int_to_ptr.vmem [resolvable:$true] %s154
          %160 = dma.hbm_to_vmem [thread:$0]  %s153, 1536, %s155, [#allocation6], 64, 64, 4
        $region16: #{tpu_custom_call.1} parent=11 // pred_fallthru
          _
        // Predicated region
        $region17: #{tpu_custom_call.1} parent=11 // pred_check
          %p161 = pneg %p85
        $region18: #{tpu_custom_call.1} parent=11 // pred_check_branch
          %163 = sbr.rel (%p161) target = $region20
        $region19: #{tpu_custom_call.1} parent=11 // pred_region
          %165 = vsyncadd [#allocation6], 0
          %s166 = sshll.u32 %s2, 4
          %s167 = int_to_ptr.hbm [resolvable:$true] %s166
          %s168 = sshll.u32 [#allocation7], 4
          %s169 = int_to_ptr.vmem [resolvable:$true] %s168
          %174 = dma.hbm_to_vmem [thread:$0]  %s167, 3072, %s169, [#allocation6], 64, 64, 4
        $region20: #{tpu_custom_call.1} parent=11 // pred_fallthru
          _
        // Predicated region
        $region21: #{tpu_custom_call.1} parent=11 // pred_check
          %p175 = pneg %p106
        $region22: #{tpu_custom_call.1} parent=11 // pred_check_branch
          %177 = sbr.rel (%p175) target = $region24
        $region23: #{tpu_custom_call.1} parent=11 // pred_region
          _
        $region24: #{tpu_custom_call.1} parent=11 // pred_fallthru
          _
      $region12: #{tpu_custom_call.1} parent=5 // pred_fallthru
        _
      %p178 = scmp.lt.s32.totalorder %s17, 2
      // Predicated region
      $region25: #{tpu_custom_call.1} parent=5 // pred_check
        %p179 = pneg %p178
      $region26: #{tpu_custom_call.1} parent=5 // pred_check_branch
        %181 = sbr.rel (%p179) target = $region28
      $region27: #{tpu_custom_call.1} parent=5 // pred_region
        // Predicated region
        $region29: #{tpu_custom_call.1} parent=27 // pred_check
          %p182 = pneg %p37
        $region30: #{tpu_custom_call.1} parent=27 // pred_check_branch
          %184 = sbr.rel (%p182) target = $region32
        $region31: #{tpu_custom_call.1} parent=27 // pred_region
          %s185 = sand.u32 %s27, 1
          %s186 = scalar_lea.sflag [#allocation3], %s185
          %s187 = sand.u32 %s27, 1
          %s188 = smul.addr %s187, 8
          %s189 = scalar_lea.vmem [#allocation2], %s188
          %191 = vsyncadd %s186, 0
          %s192 = smul.addr %s17, 2
          %s193 = smul.addr %s192, 4
          %s194 = scalar_lea.hbm %s0, %s193
          %s195 = sshll.u32 %s194, 4
          %s196 = int_to_ptr.hbm [resolvable:$true] %s195
          %s197 = sshll.u32 %s189, 4
          %s198 = int_to_ptr.vmem [resolvable:$true] %s197
          %203 = dma.hbm_to_vmem [thread:$0]  %s196, 128, %s198, %s186, 64, 64, 4
        $region32: #{tpu_custom_call.1} parent=27 // pred_fallthru
          _
      $region28: #{tpu_custom_call.1} parent=5 // pred_fallthru
        _
      %p204 = scmp.le.s32.totalorder 1, %s17
      %p205 = scmp.lt.s32.totalorder %s17, 3
      %p206 = pnand %p204, %p205
      %p207 = pneg %p206
      // Predicated region
      $region33: #{tpu_custom_call.1} parent=5 // pred_check
        _
      $region34: #{tpu_custom_call.1} parent=5 // pred_check_branch
        %209 = sbr.rel (%p206) target = $region36
      $region35: #{tpu_custom_call.1} parent=5 // pred_region
        %s210 = ssub.s32 %s17, 1
        %s211 = sand.u32 %s30, 1
        %s212 = scalar_lea.sflag [#allocation3], %s211
        %s213 = sand.u32 %s30, 1
        %s214 = smul.addr %s213, 8
        %s215 = scalar_lea.vmem [#allocation2], %s214
        // Predicated region
        $region37: #{tpu_custom_call.1} parent=35 // pred_check
          %p216 = pneg %p43
        $region38: #{tpu_custom_call.1} parent=35 // pred_check_branch
          %218 = sbr.rel (%p216) target = $region40
        $region39: #{tpu_custom_call.1} parent=35 // pred_region
          %220 = dma.done %s212, 128
        $region40: #{tpu_custom_call.1} parent=35 // pred_fallthru
          _
        // Predicated region
        $region41: #{tpu_custom_call.1} parent=35 // pred_check
          %p221 = pneg %p64
        $region42: #{tpu_custom_call.1} parent=35 // pred_check_branch
          %223 = sbr.rel (%p221) target = $region44
        $region43: #{tpu_custom_call.1} parent=35 // pred_region
          %225 = dma.done [#allocation6], 1536
        $region44: #{tpu_custom_call.1} parent=35 // pred_fallthru
          _
        // Predicated region
        $region45: #{tpu_custom_call.1} parent=35 // pred_check
          %p226 = pneg %p85
        $region46: #{tpu_custom_call.1} parent=35 // pred_check_branch
          %228 = sbr.rel (%p226) target = $region48
        $region47: #{tpu_custom_call.1} parent=35 // pred_region
          %230 = dma.done [#allocation6], 3072
        $region48: #{tpu_custom_call.1} parent=35 // pred_fallthru
          _
        %s231 = sand.u32 %s30, 1
        %s232 = scalar_lea.sflag [#allocation3], %s231
        %s233 = sand.u32 %s30, 1
        %s234 = smul.addr %s233, 8
        %s235 = scalar_lea.vmem [#allocation2], %s234
        %p236 = pneg %p43
        %p237 = pneg %p40
        %p238 = pneg %p64
        %p239 = pneg %p61
        %p240 = pneg %p85
        %p241 = pneg %p82
        %p242 = pneg %p106
        %p243 = pneg %p103
        %p244 = pneg %p132
        %p245 = pneg %p129
        %s246 = sand.u32 %s119, 1
        %s247 = scalar_lea.sflag [#allocation4], %s246
        %s248 = sand.u32 %s119, 1
        %s249 = smul.addr %s248, 16
        %s250 = scalar_lea.vmem [#allocation8], %s249
        %v252 = vld [vmem:[%s3] sm:$0x3]
        %v253 = vld [vmem:[%s215] sm:$0xf]
        %v254 = vld [vmem:[%s215 + $0x4] sm:$0xf]
        %v257 = vunpack.c.l.b16 %v253
        %v258 = vunpack.c.l.b16 %v254
        %v259 = vpack.c.b16 %v258, %v257
        %v261 = vshrl.u32 %v259, 16
        %v263 = vrot.slane %v261, 7
        %v264 = vshll.u32 %v259, 16
        %v266 = vor.u32 %v263, %v264
        %vm269 = vcmask 1040384
        %vm270 = vsmask.f32 256
        %vm271 = vmand %vm269, %vm270
        %v272 = vsel %vm271, 0, %v266
        %v273 = vsel %vm271, %v263, 0
        %vm274 = vsmask.f32 7424
        %v276 = vshrl.u32 %v272, 16
        %v278 = vshll.u32 %v272, 16
        %v280 = vrot.slane %v278, 1
        %v281 = vor.u32 %v276, %v280
        %v283 = vshll.u32 %v273, 16
        %v285 = vrot.slane %v283, 1
        %v286 = vsel %vm274, %v281, %v285
        %287 = vrot.lane.b32.xlu0 %v286, 64
        %v288 = vpop.permute.xlu0 %287
        %vm291 = vcmask 1046528
        %v292 = vrot.slane %v272, 1
        %v293 = vrot.slane %v273, 1
        %v294 = vsel %vm291, %v292, %v293
        %vm295 = vcmask 523264
        %v297 = vsel %vm295, %v272, %v288
        %v299 = vld [vmem:[#allocation5] sm:$0xf]
        %v300 = vld [vmem:[#allocation5 + $0x4] sm:$0xf]
        %v301 = vld [vmem:[#allocation5 + $0x8] sm:$0xf]
        %v302 = vld [vmem:[#allocation5 + $0xc] sm:$0xf]
        %v303 = vld [vmem:[#allocation5 + $0x10] sm:$0xf]
        %v304 = vld [vmem:[#allocation5 + $0x14] sm:$0xf]
        %v305 = vld [vmem:[#allocation5 + $0x18] sm:$0xf]
        %v306 = vld [vmem:[#allocation5 + $0x1c] sm:$0xf]
        %v307 = vld [vmem:[#allocation5 + $0x20] sm:$0xf]
        %v308 = vld [vmem:[#allocation5 + $0x24] sm:$0xf]
        %v309 = vld [vmem:[#allocation5 + $0x28] sm:$0xf]
        %v310 = vld [vmem:[#allocation5 + $0x2c] sm:$0xf]
        %v311 = vld [vmem:[#allocation5 + $0x30] sm:$0xf]
        %v312 = vld [vmem:[#allocation5 + $0x34] sm:$0xf]
        %v313 = vld [vmem:[#allocation5 + $0x38] sm:$0xf]
        %v314 = vld [vmem:[#allocation5 + $0x3c] sm:$0xf]
        %v315 = vld [vmem:[#allocation5 + $0x40] sm:$0xf]
        %v316 = vld [vmem:[#allocation5 + $0x44] sm:$0xf]
        %v317 = vld [vmem:[#allocation5 + $0x48] sm:$0xf]
        %v318 = vld [vmem:[#allocation5 + $0x4c] sm:$0xf]
        %v319 = vld [vmem:[#allocation5 + $0x50] sm:$0xf]
        %v320 = vld [vmem:[#allocation5 + $0x54] sm:$0xf]
        %v321 = vld [vmem:[#allocation5 + $0x58] sm:$0xf]
        %v322 = vld [vmem:[#allocation5 + $0x5c] sm:$0xf]
        %v323 = vperm.slane %v252, 0
        %v348 = vunpack.c.l.b16 %v299
        %v349 = vunpack.c.l.b16 %v300
        %v350 = vunpack.c.l.b16 %v301
        %v351 = vunpack.c.l.b16 %v302
        %v352 = vunpack.c.l.b16 %v303
        %v353 = vunpack.c.l.b16 %v304
        %v354 = vunpack.c.l.b16 %v305
        %v355 = vunpack.c.l.b16 %v306
        %v356 = vunpack.c.l.b16 %v307
        %v357 = vunpack.c.l.b16 %v308
        %v358 = vunpack.c.l.b16 %v309
        %v359 = vunpack.c.l.b16 %v310
        %v360 = vunpack.c.l.b16 %v311
        %v361 = vunpack.c.l.b16 %v312
        %v362 = vunpack.c.l.b16 %v313
        %v363 = vunpack.c.l.b16 %v314
        %v364 = vunpack.c.l.b16 %v315
        %v365 = vunpack.c.l.b16 %v316
        %v366 = vunpack.c.l.b16 %v317
        %v367 = vunpack.c.l.b16 %v318
        %v368 = vunpack.c.l.b16 %v319
        %v369 = vunpack.c.l.b16 %v320
        %v370 = vunpack.c.l.b16 %v321
        %v371 = vunpack.c.l.b16 %v322
        %v372 = vpack.c.b16 %v349, %v348
        %v373 = vpack.c.b16 %v351, %v350
        %v374 = vpack.c.b16 %v353, %v352
        %v375 = vpack.c.b16 %v355, %v354
        %v376 = vpack.c.b16 %v357, %v356
        %v377 = vpack.c.b16 %v359, %v358
        %v378 = vpack.c.b16 %v361, %v360
        %v379 = vpack.c.b16 %v363, %v362
        %v380 = vpack.c.b16 %v365, %v364
        %v381 = vpack.c.b16 %v367, %v366
        %v382 = vpack.c.b16 %v369, %v368
        %v383 = vpack.c.b16 %v371, %v370
        %v397 = vsel %vm295, %v294, 0
        %399 = vmatpush.bf16.msra.mxu0 %v379
        %400 = vmatpush.bf16.msra.mxu0 %v378
        %401 = vmatpush.bf16.msra.mxu0 %v377
        %402 = vmatpush.bf16.msra.mxu0 %v376
        %403 = vmatpush.bf16.msra.mxu0 %v375
        %404 = vmatpush.bf16.msra.mxu0 %v374
        %405 = vmatpush.bf16.msra.mxu0 %v373
        %406 = vmatpush.bf16.msra.mxu0 %v372
        %407 = vmatmul.bf16.gmra.mxu0 %v297
        %v408 = vpop.f32.mrf.mxu0
        %v409 = vadd.f32 %v323, %v408
        %v410 = vpop.f32.mrf.mxu0
        %v411 = vadd.f32 %v323, %v410
        %412 = vdwg.mxu0
        %413 = vmatpush.bf16.msra.mxu0 0
        %414 = vmatpush.bf16.msra.mxu0 0
        %415 = vmatpush.bf16.msra.mxu0 0
        %416 = vmatpush.bf16.msra.mxu0 0
        %417 = vmatpush.bf16.msra.mxu0 %v383
        %418 = vmatpush.bf16.msra.mxu0 %v382
        %419 = vmatpush.bf16.msra.mxu0 %v381
        %420 = vmatpush.bf16.msra.mxu0 %v380
        %421 = vmatmul.bf16.gmra.mxu0 %v397
        %v422 = vpop.f32.mrf.mxu0
        %v423 = vadd.f32 %v409, %v422
        %v424 = vpop.f32.mrf.mxu0
        %v425 = vadd.f32 %v411, %v424
        %426 = vdwg.mxu0
        %v427 = vmax.f32 %v423, 0.0
        %v428 = vmax.f32 %v425, 0.0
        %v429 = vpack.c.bf16 %v427, %v427
        %v430 = vpack.c.bf16 %v428, %v428
        %v433 = vunpack.c.l.b16 %v429
        %v434 = vunpack.c.l.b16 %v430
        %v435 = vpack.c.b16 %v434, %v433
        %v437 = vshrl.u32 %v435, 16
        %v439 = vrot.slane %v437, 7
        %v440 = vshll.u32 %v435, 16
        %v442 = vor.u32 %v439, %v440
        %v445 = vsel %vm271, 0, %v442
        %v446 = vsel %vm271, %v439, 0
        %v448 = vshrl.u32 %v445, 16
        %v450 = vshll.u32 %v445, 16
        %v452 = vrot.slane %v450, 1
        %v453 = vor.u32 %v448, %v452
        %v455 = vshll.u32 %v446, 16
        %v457 = vrot.slane %v455, 1
        %v458 = vsel %vm274, %v453, %v457
        %v462 = vrot.slane %v445, 1
        %v463 = vrot.slane %v446, 1
        %v464 = vsel %vm291, %v462, %v463
        %v466 = vld [vmem:[#allocation7] sm:$0xf]
        %v467 = vld [vmem:[#allocation7 + $0x4] sm:$0xf]
        %v468 = vld [vmem:[#allocation7 + $0x8] sm:$0xf]
        %v469 = vld [vmem:[#allocation7 + $0xc] sm:$0xf]
        %v470 = vld [vmem:[#allocation7 + $0x10] sm:$0xf]
        %v471 = vld [vmem:[#allocation7 + $0x14] sm:$0xf]
        %v472 = vld [vmem:[#allocation7 + $0x18] sm:$0xf]
        %v473 = vld [vmem:[#allocation7 + $0x1c] sm:$0xf]
        %v474 = vld [vmem:[#allocation7 + $0x20] sm:$0xf]
        %v475 = vld [vmem:[#allocation7 + $0x24] sm:$0xf]
        %v476 = vld [vmem:[#allocation7 + $0x28] sm:$0xf]
        %v477 = vld [vmem:[#allocation7 + $0x2c] sm:$0xf]
        %v478 = vld [vmem:[#allocation7 + $0x30] sm:$0xf]
        %v479 = vld [vmem:[#allocation7 + $0x34] sm:$0xf]
        %v480 = vld [vmem:[#allocation7 + $0x38] sm:$0xf]
        %v481 = vld [vmem:[#allocation7 + $0x3c] sm:$0xf]
        %v482 = vld [vmem:[#allocation7 + $0x40] sm:$0xf]
        %v483 = vld [vmem:[#allocation7 + $0x44] sm:$0xf]
        %v484 = vld [vmem:[#allocation7 + $0x48] sm:$0xf]
        %v485 = vld [vmem:[#allocation7 + $0x4c] sm:$0xf]
        %v486 = vld [vmem:[#allocation7 + $0x50] sm:$0xf]
        %v487 = vld [vmem:[#allocation7 + $0x54] sm:$0xf]
        %v488 = vld [vmem:[#allocation7 + $0x58] sm:$0xf]
        %v489 = vld [vmem:[#allocation7 + $0x5c] sm:$0xf]
        %v490 = vld [vmem:[#allocation7 + $0x60] sm:$0xf]
        %v491 = vld [vmem:[#allocation7 + $0x64] sm:$0xf]
        %v492 = vld [vmem:[#allocation7 + $0x68] sm:$0xf]
        %v493 = vld [vmem:[#allocation7 + $0x6c] sm:$0xf]
        %v494 = vld [vmem:[#allocation7 + $0x70] sm:$0xf]
        %v495 = vld [vmem:[#allocation7 + $0x74] sm:$0xf]
        %v496 = vld [vmem:[#allocation7 + $0x78] sm:$0xf]
        %v497 = vld [vmem:[#allocation7 + $0x7c] sm:$0xf]
        %v498 = vld [vmem:[#allocation7 + $0x80] sm:$0xf]
        %v499 = vld [vmem:[#allocation7 + $0x84] sm:$0xf]
        %v500 = vld [vmem:[#allocation7 + $0x88] sm:$0xf]
        %v501 = vld [vmem:[#allocation7 + $0x8c] sm:$0xf]
        %v502 = vld [vmem:[#allocation7 + $0x90] sm:$0xf]
        %v503 = vld [vmem:[#allocation7 + $0x94] sm:$0xf]
        %v504 = vld [vmem:[#allocation7 + $0x98] sm:$0xf]
        %v505 = vld [vmem:[#allocation7 + $0x9c] sm:$0xf]
        %v506 = vld [vmem:[#allocation7 + $0xa0] sm:$0xf]
        %v507 = vld [vmem:[#allocation7 + $0xa4] sm:$0xf]
        %v508 = vld [vmem:[#allocation7 + $0xa8] sm:$0xf]
        %v509 = vld [vmem:[#allocation7 + $0xac] sm:$0xf]
        %v510 = vld [vmem:[#allocation7 + $0xb0] sm:$0xf]
        %v511 = vld [vmem:[#allocation7 + $0xb4] sm:$0xf]
        %v512 = vld [vmem:[#allocation7 + $0xb8] sm:$0xf]
        %v513 = vld [vmem:[#allocation7 + $0xbc] sm:$0xf]
        %v514 = vperm.slane %v252, 1
        %v563 = vunpack.c.l.b16 %v466
        %v564 = vunpack.c.l.b16 %v467
        %v565 = vunpack.c.l.b16 %v468
        %v566 = vunpack.c.l.b16 %v469
        %v567 = vunpack.c.l.b16 %v470
        %v568 = vunpack.c.l.b16 %v471
        %v569 = vunpack.c.l.b16 %v472
        %v570 = vunpack.c.l.b16 %v473
        %v571 = vunpack.c.l.b16 %v474
        %v572 = vunpack.c.l.b16 %v475
        %v573 = vunpack.c.l.b16 %v476
        %v574 = vunpack.c.l.b16 %v477
        %v575 = vunpack.c.l.b16 %v478
        %v576 = vunpack.c.l.b16 %v479
        %v577 = vunpack.c.l.b16 %v480
        %v578 = vunpack.c.l.b16 %v481
        %v579 = vunpack.c.l.b16 %v482
        %v580 = vunpack.c.l.b16 %v483
        %v581 = vunpack.c.l.b16 %v484
        %v582 = vunpack.c.l.b16 %v485
        %v583 = vunpack.c.l.b16 %v486
        %v584 = vunpack.c.l.b16 %v487
        %v585 = vunpack.c.l.b16 %v488
        %v586 = vunpack.c.l.b16 %v489
        %v587 = vunpack.c.l.b16 %v490
        %v588 = vunpack.c.l.b16 %v491
        %v589 = vunpack.c.l.b16 %v492
        %v590 = vunpack.c.l.b16 %v493
        %v591 = vunpack.c.l.b16 %v494
        %v592 = vunpack.c.l.b16 %v495
        %v593 = vunpack.c.l.b16 %v496
        %v594 = vunpack.c.l.b16 %v497
        %v595 = vunpack.c.l.b16 %v498
        %v596 = vunpack.c.l.b16 %v499
        %v597 = vunpack.c.l.b16 %v500
        %v598 = vunpack.c.l.b16 %v501
        %v599 = vunpack.c.l.b16 %v502
        %v600 = vunpack.c.l.b16 %v503
        %v601 = vunpack.c.l.b16 %v504
        %v602 = vunpack.c.l.b16 %v505
        %v603 = vunpack.c.l.b16 %v506
        %v604 = vunpack.c.l.b16 %v507
        %v605 = vunpack.c.l.b16 %v508
        %v606 = vunpack.c.l.b16 %v509
        %v607 = vunpack.c.l.b16 %v510
        %v608 = vunpack.c.l.b16 %v511
        %v609 = vunpack.c.l.b16 %v512
        %v610 = vunpack.c.l.b16 %v513
        %v611 = vpack.c.b16 %v564, %v563
        %v612 = vpack.c.b16 %v566, %v565
        %v613 = vpack.c.b16 %v568, %v567
        %v614 = vpack.c.b16 %v570, %v569
        %v615 = vpack.c.b16 %v572, %v571
        %v616 = vpack.c.b16 %v574, %v573
        %v617 = vpack.c.b16 %v576, %v575
        %v618 = vpack.c.b16 %v578, %v577
        %v619 = vpack.c.b16 %v580, %v579
        %v620 = vpack.c.b16 %v582, %v581
        %v621 = vpack.c.b16 %v584, %v583
        %v622 = vpack.c.b16 %v586, %v585
        %v623 = vpack.c.b16 %v588, %v587
        %v624 = vpack.c.b16 %v590, %v589
        %v625 = vpack.c.b16 %v592, %v591
        %v626 = vpack.c.b16 %v594, %v593
        %v627 = vpack.c.b16 %v596, %v595
        %v628 = vpack.c.b16 %v598, %v597
        %v629 = vpack.c.b16 %v600, %v599
        %v630 = vpack.c.b16 %v602, %v601
        %v631 = vpack.c.b16 %v604, %v603
        %v632 = vpack.c.b16 %v606, %v605
        %v633 = vpack.c.b16 %v608, %v607
        %v634 = vpack.c.b16 %v610, %v609
        %659 = vmatpush.bf16.msra.mxu0 %v618
        %660 = vmatpush.bf16.msra.mxu0 %v617
        %661 = vmatpush.bf16.msra.mxu0 %v616
        %662 = vmatpush.bf16.msra.mxu0 %v615
        %663 = vmatpush.bf16.msra.mxu0 %v614
        %664 = vmatpush.bf16.msra.mxu0 %v613
        %665 = vmatpush.bf16.msra.mxu0 %v612
        %666 = vmatpush.bf16.msra.mxu0 %v611
        %667 = vmatmul.bf16.gmra.mxu0 %v445
        %v668 = vpop.f32.mrf.mxu0
        %v669 = vadd.f32 %v514, %v668
        %v670 = vpop.f32.mrf.mxu0
        %v671 = vadd.f32 %v514, %v670
        %672 = vdwg.mxu0
        %673 = vmatpush.bf16.msra.mxu0 %v626
        %674 = vmatpush.bf16.msra.mxu0 %v625
        %675 = vmatpush.bf16.msra.mxu0 %v624
        %676 = vmatpush.bf16.msra.mxu0 %v623
        %677 = vmatpush.bf16.msra.mxu0 %v622
        %678 = vmatpush.bf16.msra.mxu0 %v621
        %679 = vmatpush.bf16.msra.mxu0 %v620
        %680 = vmatpush.bf16.msra.mxu0 %v619
        %681 = vmatmul.bf16.gmra.mxu0 %v458
        %v682 = vpop.f32.mrf.mxu0
        %v683 = vadd.f32 %v669, %v682
        %v684 = vpop.f32.mrf.mxu0
        %v685 = vadd.f32 %v671, %v684
        %686 = vdwg.mxu0
        %687 = vmatpush.bf16.msra.mxu0 %v634
        %688 = vmatpush.bf16.msra.mxu0 %v633
        %689 = vmatpush.bf16.msra.mxu0 %v632
        %690 = vmatpush.bf16.msra.mxu0 %v631
        %691 = vmatpush.bf16.msra.mxu0 %v630
        %692 = vmatpush.bf16.msra.mxu0 %v629
        %693 = vmatpush.bf16.msra.mxu0 %v628
        %694 = vmatpush.bf16.msra.mxu0 %v627
        %695 = vmatmul.bf16.gmra.mxu0 %v464
        %v696 = vpop.f32.mrf.mxu0
        %v697 = vadd.f32 %v683, %v696
        %v698 = vpop.f32.mrf.mxu0
        %v699 = vadd.f32 %v685, %v698
        %700 = vdwg.mxu0
        %v701 = vmax.f32 %v697, 0.0
        %v702 = vmax.f32 %v699, 0.0
        %703 = vst [vmem:[%s250] sm:$0xff] %v701
        %704 = vst [vmem:[%s250 + $0x8] sm:$0xff] %v702
        %s705 = sand.u32 %s119, 1
        %s706 = scalar_lea.sflag [#allocation4], %s705
        %s707 = sand.u32 %s119, 1
        %s708 = smul.addr %s707, 16
        %s709 = scalar_lea.vmem [#allocation8], %s708
        // Predicated region
        $region49: #{tpu_custom_call.1} parent=35 // pred_check
          %p710 = pneg %p129
        $region50: #{tpu_custom_call.1} parent=35 // pred_check_branch
          %712 = sbr.rel (%p710) target = $region52
        $region51: #{tpu_custom_call.1} parent=35 // pred_region
          %714 = vsyncadd %s706, 0
          %s715 = smul.addr %s22, 2
          %s716 = smul.addr %s715, 8
          %s717 = scalar_lea.hbm %s4, %s716
          %s718 = sshll.u32 %s709, 4
          %s719 = int_to_ptr.vmem [resolvable:$true] %s718
          %s720 = sshll.u32 %s717, 4
          %s721 = int_to_ptr.hbm [resolvable:$true] %s720
          %726 = dma.vmem_to_hbm [thread:$0]  %s719, 256, %s721, %s706, 128, 128, 8
        $region52: #{tpu_custom_call.1} parent=35 // pred_fallthru
          _
      $region36: #{tpu_custom_call.1} parent=5 // pred_fallthru
        _
      %p727 = scmp.le.s32.totalorder 2, %s17
      // Predicated region
      $region53: #{tpu_custom_call.1} parent=5 // pred_check
        %p728 = pneg %p727
      $region54: #{tpu_custom_call.1} parent=5 // pred_check_branch
        %730 = sbr.rel (%p728) target = $region56
      $region55: #{tpu_custom_call.1} parent=5 // pred_region
        %s731 = ssub.s32 %s17, 2
        // Predicated region
        $region57: #{tpu_custom_call.1} parent=55 // pred_check
          %p732 = pneg %p135
        $region58: #{tpu_custom_call.1} parent=55 // pred_check_branch
          %734 = sbr.rel (%p732) target = $region60
        $region59: #{tpu_custom_call.1} parent=55 // pred_region
          %s735 = sand.u32 %s120, 1
          %s736 = scalar_lea.sflag [#allocation4], %s735
          %s737 = sand.u32 %s120, 1
          %s738 = smul.addr %s737, 16
          %s739 = scalar_lea.vmem [#allocation8], %s738
          %741 = dma.done %s736, 256
        $region60: #{tpu_custom_call.1} parent=55 // pred_fallthru
          _
      $region56: #{tpu_custom_call.1} parent=5 // pred_fallthru
        _
    $region6: #{tpu_custom_call.1} parent=1 // loop_footer
      %s21 = sadd.s32 1, %s17
    $region7: #{tpu_custom_call.1} parent=1 // loop_footer_branch
      %16 = sbr.rel target = $region3
    $region8: #{tpu_custom_call.1} parent=1 // loop_exit
      _
    %742 = vsyncpa [#allocation3], 1
    %s743 = scalar_lea.sflag [#allocation3], 1
    %744 = vsyncpa %s743, 1
    %745 = vsyncpa [#allocation6], 1
    %746 = vsyncpa [#allocation4], 1
    %s747 = scalar_lea.sflag [#allocation4], 1
    %748 = vsyncpa %s747, 1

</llo_original>
